<compile_context>
chip_gen: v7x
topology: tpu7x:2x2x1
jax: 0.10.0
libtpu: 0.0.40
codegen_flags: <defaults>
</compile_context>

<pallas_src>
import functools

import jax
import jax.numpy as jnp
from jax.experimental import pallas as pl
from jax.experimental.pallas import tpu as pltpu


# Per-step VMEM working-set target and compiler scoped-VMEM limit.
# v5e/v6e physical VMEM = 128 MiB, v7x = 64 MiB; default scoped limits 16/32/32 MiB.
_VMEM_STEP_BUDGET = 28 * 1024 * 1024
_VMEM_LIMIT_BYTES = 48 * 1024 * 1024
_TN_CAP = 32 * 1024  # hard lane cap per grid step


def _round_up(x, m):
    return (x + m - 1) // m * m


def _choose_tn(B, C, HW, in_dtype):
    """Pixel-tile width: as wide as fits the per-step VMEM budget (multiple of 128,
    <= _TN_CAP), accounting for sublane padding and in-kernel temporaries."""
    itemsize = jnp.dtype(in_dtype).itemsize
    c_in = _round_up(C, 32 // itemsize)   # input sublane tile: 8 (f32) / 16 (bf16) / 32 (i8)
    c_f32 = _round_up(C, 8)               # f32-temporary sublane tile
    per_lane = (
        2 * 2 * B * c_in * itemsize       # 2 logits inputs, double-buffered
        + 2 * B * 8 * 4                   # (B,1,TN) f32 raw output block, sublane-padded, 2 bufs
        + 4 * B * c_f32 * 4               # allowance for in-kernel elementwise temporaries
    )
    cap = max(128, (_VMEM_STEP_BUDGET // per_lane) // 128 * 128)
    tn = min(cap, _TN_CAP)
    if HW < 128:
        return HW                         # single block equal to the full (short) dim
    return min(tn, (HW // 128) * 128)


def _tile_raw_kl(x, t):
    """Per-pixel KL(q || p) over channels for (B, C, TN) logit tiles -> (B, 1, TN) f32.

    Elementwise math (shift, exp, products) stays in the input dtype (bf16 inputs run the
    bf16 VPU/EUP path); channel reductions, logs and the reciprocal are f32.
    """
    x_sh = x - jnp.max(x, axis=1, keepdims=True)
    t_sh = t - jnp.max(t, axis=1, keepdims=True)
    e_x = jnp.exp(x_sh)
    e_t = jnp.exp(t_sh)
    s_x = jnp.sum(e_x.astype(jnp.float32), axis=1, keepdims=True)       # (B,1,TN)
    s_t = jnp.sum(e_t.astype(jnp.float32), axis=1, keepdims=True)
    num = jnp.sum((e_t * (t_sh - x_sh)).astype(jnp.float32), axis=1, keepdims=True)
    # sum_c q*(log q - log p) == num / s_t + log(s_x) - log(s_t)
    return num * pl.reciprocal(s_t) + (jnp.log(s_x) - jnp.log(s_t))


def _raw_kernel(x_ref, t_ref, raw_ref):
    raw_ref[...] = _tile_raw_kl(x_ref[...], t_ref[...])


def _sum_kernel(x_ref, t_ref, sum_ref, *, hw, tn):
    i = pl.program_id(0)

    @pl.when(i == 0)
    def _():
        sum_ref[...] = jnp.zeros_like(sum_ref)

    raw = _tile_raw_kl(x_ref[...], t_ref[...])          # (B, 1, TN) f32
    if hw % tn != 0:
        # Last tile is partial: lanes past HW hold stale VMEM -> mask them out.
        lane = jax.lax.broadcasted_iota(jnp.int32, raw.shape, 2)
        raw = jnp.where(i * tn + lane < hw, raw, 0.0)
    sum_ref[...] = sum_ref[...] + jnp.sum(raw, keepdims=True).reshape(1, 1)


def _logit_specs(B, C, tn):
    return [
        pl.BlockSpec((B, C, tn), lambda i: (0, 0, i)),
        pl.BlockSpec((B, C, tn), lambda i: (0, 0, i)),
    ]


def _run_kl_raw(x, t, tn):
    """x, t: (B, C, HW) logits.  Returns per-pixel KL map of shape (B, 1, HW) f32."""
    B, C, HW = x.shape
    return pl.pallas_call(
        _raw_kernel,
        out_shape=jax.ShapeDtypeStruct((B, 1, HW), jnp.float32),
        grid_spec=pltpu.PrefetchScalarGridSpec(
            num_scalar_prefetch=0,
            grid=(pl.cdiv(HW, tn),),
            in_specs=_logit_specs(B, C, tn),
            out_specs=pl.BlockSpec((B, 1, tn), lambda i: (0, 0, i)),
        ),
        compiler_params=pltpu.CompilerParams(
            dimension_semantics=("parallel",),
            vmem_limit_bytes=_VMEM_LIMIT_BYTES,
        ),
    )(x, t)


def _run_kl_sum(x, t, tn):
    """x, t: (B, C, HW) logits.  Returns the scalar sum of the per-pixel KL (warm branch)."""
    B, C, HW = x.shape
    out = pl.pallas_call(
        functools.partial(_sum_kernel, hw=HW, tn=tn),
        out_shape=jax.ShapeDtypeStruct((1, 1), jnp.float32),
        grid_spec=pltpu.PrefetchScalarGridSpec(
            num_scalar_prefetch=0,
            grid=(pl.cdiv(HW, tn),),
            in_specs=_logit_specs(B, C, tn),
            out_specs=pl.BlockSpec((1, 1), lambda i: (0, 0)),
        ),
        compiler_params=pltpu.CompilerParams(
            dimension_semantics=("arbitrary",),   # resident scalar accumulator
            vmem_limit_bytes=_VMEM_LIMIT_BYTES,
        ),
    )(x, t)
    return out[0, 0]


def bootstrapped_kl(input_nchw, target_nchw, it, *, start_warm, end_warm, top_p=0.15):
    """JAX/Pallas equivalent of BootstrappedKL.forward.  `it` is a Python int."""
    B, C, H, W = input_nchw.shape
    HW = H * W

    # Free reshape (contiguous), no transpose: channels stay on sublanes, pixels on lanes.
    # Inputs keep their HBM dtype (bf16 stays bf16 -> half the HBM traffic).
    x = input_nchw.reshape(B, C, HW)
    t = target_nchw.reshape(B, C, HW)
    tn = _choose_tn(B, C, HW, x.dtype)

    if it < start_warm:
        total = _run_kl_sum(x, t, tn)
        return total / W / H, 1.0

    if it > end_warm:
        this_p = top_p
    else:
        this_p = top_p + (1 - top_p) * ((end_warm - it) / (end_warm - start_warm))

    raw_loss = _run_kl_raw(x, t, tn).reshape(-1)        # (B*HW,)
    num_pixels = raw_loss.shape[0]
    k = max(1, int(num_pixels * this_p))
    # TODO(synk): replace the full lax.top_k (sort-based on TPU) with a two-pass
    # threshold/histogram selection kernel for production frame sizes.
    top_vals, _ = jax.lax.top_k(raw_loss, k)
    return jnp.mean(top_vals), this_p


# ---------------------------------------------------------------------------
# Pure-JAX reference (correctness check only).
def _reference(input_nchw, target_nchw, it, start_warm, end_warm, top_p=0.15):
    x = input_nchw.astype(jnp.float32)
    t = target_nchw.astype(jnp.float32)
    p_log = jax.nn.log_softmax(x, axis=1)
    q = jax.nn.softmax(t, axis=1)
    kl = jnp.where(q > 0, q * (jnp.log(q) - p_log), 0.0)
    if it < start_warm:
        return kl.sum() / input_nchw.shape[-1] / input_nchw.shape[-2], 1.0
    raw = kl.sum(axis=1).reshape(-1)
    if it > end_warm:
        this_p = top_p
    else:
        this_p = top_p + (1 - top_p) * ((end_warm - it) / (end_warm - start_warm))
    k = max(1, int(raw.size * this_p))
    top_vals, _ = jax.lax.top_k(raw, k)
    return jnp.mean(top_vals), this_p


if __name__ == "__main__":
    start_warm, end_warm = 1000, 2000

    def check(B, C, H, W, dtype, rtol, atol):
        k1, k2 = jax.random.split(jax.random.fold_in(jax.random.PRNGKey(0), H * W + C))
        inp = jax.random.normal(k1, (B, C, H, W), dtype=jnp.float32).astype(dtype)
        tgt = jax.random.normal(k2, (B, C, H, W), dtype=jnp.float32).astype(dtype)
        for it in (500, 1500):  # warm branch, then bootstrapped branch
            loss, p = bootstrapped_kl(inp, tgt, it, start_warm=start_warm, end_warm=end_warm)
            loss = jax.block_until_ready(loss)
            ref_loss, ref_p = _reference(inp, tgt, it, start_warm, end_warm)
            assert abs(p - ref_p) < 1e-12, (dtype, it, p, ref_p)
            assert jnp.allclose(loss, ref_loss, rtol=rtol, atol=atol), (dtype, it, loss, ref_loss)

    # f32 logits, evenly tiled spatial extent
    check(2, 4, 16, 16, jnp.float32, rtol=1e-4, atol=1e-5)
    # f32 logits, HW not a multiple of the pixel tile (exercises in-kernel tail masking
    # for the warm accumulator and the partial output store for the raw map)
    check(2, 4, 16, 20, jnp.float32, rtol=1e-4, atol=1e-5)
    # bf16 logits (bf16 VPU/EUP path; reference runs in f32 on the bf16-rounded inputs)
    check(2, 4, 16, 16, jnp.bfloat16, rtol=5e-2, atol=5e-2)

    print("KERNEL_OK")
</pallas_src>

<mosaic_0001>
module attributes {stable_mosaic.version = 11 : i64} {
  func.func @_sum_kernel(%arg0: i32, %arg1: memref<2x4x256xf32, #tpu.memory_space<vmem>>, %arg2: memref<2x4x256xf32, #tpu.memory_space<vmem>>, %arg3: memref<1x1xf32, #tpu.memory_space<vmem>>) attributes {dimension_semantics = [#tpu.dimension_semantics<arbitrary>], iteration_bounds = array<i64: 1>, scalar_prefetch = 0 : i64, scratch_operands = 0 : i64, tpu.core_type = #tpu.core_type<tc>, window_params = [{transform_indices = @transform_0, window_bounds = array<i64: 2, 4, 256>}, {transform_indices = @transform_1, window_bounds = array<i64: 2, 4, 256>}, {pipeline_mode = #tpu.pipeline_mode<synchronous>, transform_indices = @transform_2, window_bounds = array<i64: 1, 1>}]} {
    %c0_i32 = arith.constant 0 : i32
    %0 = arith.cmpi eq, %arg0, %c0_i32 : i32
    %1 = arith.extui %0 : i1 to i32
    %c0_i32_0 = arith.constant 0 : i32
    %2 = arith.cmpi ne, %1, %c0_i32_0 : i32
    scf.if %2 {
      %cst_15 = arith.constant 0.000000e+00 : f32
      %38 = vector.broadcast %cst_15 : f32 to vector<1x1xf32>
      %c0_16 = arith.constant 0 : index
      %c0_17 = arith.constant 0 : index
      %39 = vector.load %arg3[%c0_16, %c0_17] : memref<1x1xf32, #tpu.memory_space<vmem>>, vector<1x1xf32>
      tpu.vector_store %arg3[%c0_16, %c0_17], %38 {strides = array<i32>} : memref<1x1xf32, #tpu.memory_space<vmem>>, vector<1x1xf32>,
    } else {
    }
    %c0 = arith.constant 0 : index
    %c0_1 = arith.constant 0 : index
    %c0_2 = arith.constant 0 : index
    %3 = vector.load %arg1[%c0, %c0_1, %c0_2] : memref<2x4x256xf32, #tpu.memory_space<vmem>>, vector<2x4x256xf32>
    %c0_3 = arith.constant 0 : index
    %c0_4 = arith.constant 0 : index
    %c0_5 = arith.constant 0 : index
    %4 = vector.load %arg2[%c0_3, %c0_4, %c0_5] : memref<2x4x256xf32, #tpu.memory_space<vmem>>, vector<2x4x256xf32>
    %cst = arith.constant dense<0xFF800000> : vector<2x256xf32>
    %5 = vector.multi_reduction <maximumf>, %3, %cst [1] : vector<2x4x256xf32> to vector<2x256xf32>
    %6 = vector.shape_cast %5 : vector<2x256xf32> to vector<2x1x256xf32>
    %7 = vector.broadcast %6 : vector<2x1x256xf32> to vector<2x4x256xf32>
    %8 = arith.subf %3, %7 : vector<2x4x256xf32>
    %cst_6 = arith.constant dense<0xFF800000> : vector<2x256xf32>
    %9 = vector.multi_reduction <maximumf>, %4, %cst_6 [1] : vector<2x4x256xf32> to vector<2x256xf32>
    %10 = vector.shape_cast %9 : vector<2x256xf32> to vector<2x1x256xf32>
    %11 = vector.broadcast %10 : vector<2x1x256xf32> to vector<2x4x256xf32>
    %12 = arith.subf %4, %11 : vector<2x4x256xf32>
    %13 = math.exp %8 : vector<2x4x256xf32>
    %14 = math.exp %12 : vector<2x4x256xf32>
    %cst_7 = arith.constant dense<0.000000e+00> : vector<2x256xf32>
    %15 = vector.multi_reduction <add>, %13, %cst_7 [1] : vector<2x4x256xf32> to vector<2x256xf32>
    %16 = vector.shape_cast %15 : vector<2x256xf32> to vector<2x1x256xf32>
    %cst_8 = arith.constant dense<0.000000e+00> : vector<2x256xf32>
    %17 = vector.multi_reduction <add>, %14, %cst_8 [1] : vector<2x4x256xf32> to vector<2x256xf32>
    %18 = vector.shape_cast %17 : vector<2x256xf32> to vector<2x1x256xf32>
    %19 = arith.subf %12, %8 : vector<2x4x256xf32>
    %20 = arith.mulf %14, %19 : vector<2x4x256xf32>
    %cst_9 = arith.constant dense<0.000000e+00> : vector<2x256xf32>
    %21 = vector.multi_reduction <add>, %20, %cst_9 [1] : vector<2x4x256xf32> to vector<2x256xf32>
    %22 = vector.shape_cast %21 : vector<2x256xf32> to vector<2x1x256xf32>
    %23 = tpu.reciprocal %18 : vector<2x1x256xf32> -> vector<2x1x256xf32>
    %24 = arith.mulf %22, %23 : vector<2x1x256xf32>
    %25 = math.log %16 : vector<2x1x256xf32>
    %26 = math.log %18 : vector<2x1x256xf32>
    %27 = arith.subf %25, %26 : vector<2x1x256xf32>
    %28 = arith.addf %24, %27 : vector<2x1x256xf32>
    %c0_10 = arith.constant 0 : index
    %c0_11 = arith.constant 0 : index
    %29 = vector.load %arg3[%c0_10, %c0_11] : memref<1x1xf32, #tpu.memory_space<vmem>>, vector<1x1xf32>
    %30 = vector.shape_cast %28 : vector<2x1x256xf32> to vector<1x2x1x256xf32>
    %cst_12 = arith.constant dense<0.000000e+00> : vector<1xf32>
    %31 = vector.multi_reduction <add>, %30, %cst_12 [1, 2, 3] : vector<1x2x1x256xf32> to vector<1xf32>
    %32 = vector.shape_cast %31 : vector<1xf32> to vector<1x1x1x1xf32>
    %33 = vector.extract %32[0, 0, 0, 0] : f32 from vector<1x1x1x1xf32>
    %34 = vector.broadcast %33 : f32 to vector<1x1x1xf32>
    %35 = vector.shape_cast %34 : vector<1x1x1xf32> to vector<1x1xf32>
    %36 = arith.addf %29, %35 : vector<1x1xf32>
    %c0_13 = arith.constant 0 : index
    %c0_14 = arith.constant 0 : index
    %37 = vector.load %arg3[%c0_13, %c0_14] : memref<1x1xf32, #tpu.memory_space<vmem>>, vector<1x1xf32>
    tpu.vector_store %arg3[%c0_13, %c0_14], %36 {strides = array<i32>} : memref<1x1xf32, #tpu.memory_space<vmem>>, vector<1x1xf32>,
    return
  }
  func.func @transform_0(%arg0: i32) -> (i32, i32, i32) {
    %c0_i32 = arith.constant 0 : i32
    %c0_i32_0 = arith.constant 0 : i32
    %c0_i32_1 = arith.constant 0 : i32
    return %c0_i32, %c0_i32_0, %arg0 : i32, i32, i32
  }
  func.func @transform_1(%arg0: i32) -> (i32, i32, i32) {
    %c0_i32 = arith.constant 0 : i32
    %c0_i32_0 = arith.constant 0 : i32
    %c0_i32_1 = arith.constant 0 : i32
    return %c0_i32, %c0_i32_0, %arg0 : i32, i32, i32
  }
  func.func @transform_2(%arg0: i32) -> (i32, i32) {
    %c0_i32 = arith.constant 0 : i32
    %c0_i32_0 = arith.constant 0 : i32
    %c0_i32_1 = arith.constant 0 : i32
    return %c0_i32, %c0_i32_0 : i32, i32
  }
}

</mosaic_0001>

<llo_original>
// kernel: tpu_custom_call.1
$region0: #{tpu_custom_call.1}
  #allocation0 [shape = 'u32[]', space=smem, size = 0x4, offset = 0x4, fixed_abs, tag = 'smem constant byte address 0x4 - core index']
  #allocation1 [shape = 'u32[144,128]{1,0:T(1,128)}', space=vmem, size = 0x12000, scoped, tag = 'internal scratch']
  %s0 = inlined_call_operand.hbm [shape: f32[2,4,256], index: 0, kind: input, shape index: {}]
  %s1 = inlined_call_operand.hbm [shape: f32[2,4,256], index: 1, kind: input, shape index: {}]
  %s2 = inlined_call_operand.hbm [shape: f32[1,1], index: 2, kind: output, shape index: {}]
  %s3 = sld [smem:[#allocation0]]
  $region30: #{tpu_custom_call.1} parent=0
    _
  %s5 = ssub.s32 1, %s3
  %s6 = scalar_select 0, %s5, %s3
  $region1: #{tpu_custom_call.1} parent=0
    #allocation2 [shape = 'u8[8192]{0}', space=vmem, size = 0x2000, scoped, tag = 'input window, operand 0, single buffered']
    #allocation3 [shape = 's32[1]{0}', space=sflag, size = 0x4, scoped, tag = 'scoped memory for tpu_custom_call.1']
    #allocation4 [shape = 's32[1]{0}', space=sflag, size = 0x4, scoped, tag = 'scoped memory for tpu_custom_call.1']
    #allocation5 [shape = 'u8[8192]{0}', space=vmem, size = 0x2000, scoped, tag = 'input window, operand 1, single buffered']
    #allocation6 [shape = 's32[1]{0}', space=sflag, size = 0x4, scoped, tag = 'scoped memory for tpu_custom_call.1']
    #allocation7 [shape = 'u8[512]{0}', space=vmem, size = 0x400, scoped, tag = 'output window, operand 0, single buffered']
    %7 = vsyncpa [#allocation3], 0
    %8 = vsyncpa [#allocation6], 0
    %9 = vsyncpa [#allocation4], 0
    // Predicated region
    $region2: #{tpu_custom_call.1} parent=1 // pred_check
      _
    $region3: #{tpu_custom_call.1} parent=1 // pred_check_branch
      %11 = sbr.rel (0) target = $region5
    $region4: #{tpu_custom_call.1} parent=1 // pred_region
      %s13 = ssub.s32 256, 256
      %14 = vsyncadd [#allocation3], %s13
      %s15 = sshll.u32 [#allocation2], 4
      %s16 = int_to_ptr.vmem [resolvable:$true] %s15
      %21 = dma.hbm_to_vmem [thread:$0]  %s0, 256, %s16, [#allocation3], 128, 128, 8
    $region5: #{tpu_custom_call.1} parent=1 // pred_fallthru
      _
    // Predicated region
    $region6: #{tpu_custom_call.1} parent=1 // pred_check
      _
    $region7: #{tpu_custom_call.1} parent=1 // pred_check_branch
      %23 = sbr.rel (0) target = $region9
    $region8: #{tpu_custom_call.1} parent=1 // pred_region
      %s25 = ssub.s32 256, 256
      %26 = vsyncadd [#allocation6], %s25
      %s27 = sshll.u32 [#allocation5], 4
      %s28 = int_to_ptr.vmem [resolvable:$true] %s27
      %33 = dma.hbm_to_vmem [thread:$0]  %s1, 256, %s28, [#allocation6], 128, 128, 8
    $region9: #{tpu_custom_call.1} parent=1 // pred_fallthru
      _
    // Predicated region
    $region10: #{tpu_custom_call.1} parent=1 // pred_check
      _
    $region11: #{tpu_custom_call.1} parent=1 // pred_check_branch
      %35 = sbr.rel (0) target = $region13
    $region12: #{tpu_custom_call.1} parent=1 // pred_region
      %36 = dma.done [#allocation3], 256
    $region13: #{tpu_custom_call.1} parent=1 // pred_fallthru
      _
    // Predicated region
    $region14: #{tpu_custom_call.1} parent=1 // pred_check
      _
    $region15: #{tpu_custom_call.1} parent=1 // pred_check_branch
      %38 = sbr.rel (0) target = $region17
    $region16: #{tpu_custom_call.1} parent=1 // pred_region
      %39 = dma.done [#allocation6], 256
    $region17: #{tpu_custom_call.1} parent=1 // pred_fallthru
      _
    %p40 = scmp.eq.s32.totalorder 0, 0
    // Predicated region
    $region18: #{tpu_custom_call.1} parent=1 // pred_check
      %p41 = pneg %p40
    $region19: #{tpu_custom_call.1} parent=1 // pred_check_branch
      %43 = sbr.rel (%p41) target = $region21
    $region20: #{tpu_custom_call.1} parent=1 // pred_region
      %vm44 = vcmask 0
      %45 = vst.msk [vmem:[#allocation7] sm:$0x1] %vm44, 0.0
    $region21: #{tpu_custom_call.1} parent=1 // pred_fallthru
      _
    %v46 = vld [vmem:[#allocation2] sm:$0xff]
    %v47 = vld [vmem:[#allocation2 + $0x8] sm:$0xff]
    %v48 = vld [vmem:[#allocation5] sm:$0xff]
    %v49 = vld [vmem:[#allocation5 + $0x8] sm:$0xff]
    %v52 = vcombine.high %v46, %v46
    %v53 = vcombine.high %v47, %v47
    %vm56 = vcmask 1043456
    %v57 = vsel %vm56, %v46, -inf
    %v58 = vrot.slane %v57, 4
    %v59 = vmax.f32 %v57, %v58
    %v60 = vrot.slane %v59, 2
    %v61 = vmax.f32 %v59, %v60
    %v62 = vrot.slane %v61, 1
    %v63 = vmax.f32 %v61, %v62
    %v64 = vsel %vm56, %v52, -inf
    %v65 = vrot.slane %v64, 4
    %v66 = vmax.f32 %v64, %v65
    %v67 = vrot.slane %v66, 2
    %v68 = vmax.f32 %v66, %v67
    %v69 = vrot.slane %v68, 1
    %v70 = vmax.f32 %v68, %v69
    %v71 = vsel %vm56, %v47, -inf
    %v72 = vrot.slane %v71, 4
    %v73 = vmax.f32 %v71, %v72
    %v74 = vrot.slane %v73, 2
    %v75 = vmax.f32 %v73, %v74
    %v76 = vrot.slane %v75, 1
    %v77 = vmax.f32 %v75, %v76
    %v78 = vsel %vm56, %v53, -inf
    %v79 = vrot.slane %v78, 4
    %v80 = vmax.f32 %v78, %v79
    %v81 = vrot.slane %v80, 2
    %v82 = vmax.f32 %v80, %v81
    %v83 = vrot.slane %v82, 1
    %v84 = vmax.f32 %v82, %v83
    %v89 = vcombine.low %v63, %v70
    %v90 = vcombine.low %v77, %v84
    %v93 = vsub.f32 %v46, %v89
    %v94 = vsub.f32 %v47, %v90
    %v97 = vcombine.high %v48, %v48
    %v98 = vcombine.high %v49, %v49
    %v101 = vsel %vm56, %v48, -inf
    %v102 = vrot.slane %v101, 4
    %v103 = vmax.f32 %v101, %v102
    %v104 = vrot.slane %v103, 2
    %v105 = vmax.f32 %v103, %v104
    %v106 = vrot.slane %v105, 1
    %v107 = vmax.f32 %v105, %v106
    %v108 = vsel %vm56, %v97, -inf
    %v109 = vrot.slane %v108, 4
    %v110 = vmax.f32 %v108, %v109
    %v111 = vrot.slane %v110, 2
    %v112 = vmax.f32 %v110, %v111
    %v113 = vrot.slane %v112, 1
    %v114 = vmax.f32 %v112, %v113
    %v115 = vsel %vm56, %v49, -inf
    %v116 = vrot.slane %v115, 4
    %v117 = vmax.f32 %v115, %v116
    %v118 = vrot.slane %v117, 2
    %v119 = vmax.f32 %v117, %v118
    %v120 = vrot.slane %v119, 1
    %v121 = vmax.f32 %v119, %v120
    %v122 = vsel %vm56, %v98, -inf
    %v123 = vrot.slane %v122, 4
    %v124 = vmax.f32 %v122, %v123
    %v125 = vrot.slane %v124, 2
    %v126 = vmax.f32 %v124, %v125
    %v127 = vrot.slane %v126, 1
    %v128 = vmax.f32 %v126, %v127
    %v133 = vcombine.low %v107, %v114
    %v134 = vcombine.low %v121, %v128
    %v137 = vsub.f32 %v48, %v133
    %v138 = vsub.f32 %v49, %v134
    %v139 = vmul.f32 %v93, 1.442695
    %v140 = vpow.pop %v139
    %v141 = vmul.f32 %v94, 1.442695
    %v142 = vpow.pop %v141
    %v143 = vmul.f32 %v137, 1.442695
    %v144 = vpow.pop %v143
    %v145 = vmul.f32 %v138, 1.442695
    %v146 = vpow.pop %v145
    %v149 = vcombine.high %v140, %v140
    %v150 = vcombine.high %v142, %v142
    %v153 = vsel %vm56, %v140, 0.0
    %v154 = vrot.slane %v153, 4
    %v155 = vadd.f32 %v153, %v154
    %v156 = vrot.slane %v155, 2
    %v157 = vadd.f32 %v155, %v156
    %v158 = vrot.slane %v157, 1
    %v159 = vadd.f32 %v157, %v158
    %v160 = vsel %vm56, %v149, 0.0
    %v161 = vrot.slane %v160, 4
    %v162 = vadd.f32 %v160, %v161
    %v163 = vrot.slane %v162, 2
    %v164 = vadd.f32 %v162, %v163
    %v165 = vrot.slane %v164, 1
    %v166 = vadd.f32 %v164, %v165
    %v167 = vsel %vm56, %v142, 0.0
    %v168 = vrot.slane %v167, 4
    %v169 = vadd.f32 %v167, %v168
    %v170 = vrot.slane %v169, 2
    %v171 = vadd.f32 %v169, %v170
    %v172 = vrot.slane %v171, 1
    %v173 = vadd.f32 %v171, %v172
    %v174 = vsel %vm56, %v150, 0.0
    %v175 = vrot.slane %v174, 4
    %v176 = vadd.f32 %v174, %v175
    %v177 = vrot.slane %v176, 2
    %v178 = vadd.f32 %v176, %v177
    %v179 = vrot.slane %v178, 1
    %v180 = vadd.f32 %v178, %v179
    %v183 = vcombine.high %v144, %v144
    %v184 = vcombine.high %v146, %v146
    %v187 = vsel %vm56, %v144, 0.0
    %v188 = vrot.slane %v187, 4
    %v189 = vadd.f32 %v187, %v188
    %v190 = vrot.slane %v189, 2
    %v191 = vadd.f32 %v189, %v190
    %v192 = vrot.slane %v191, 1
    %v193 = vadd.f32 %v191, %v192
    %v194 = vsel %vm56, %v183, 0.0
    %v195 = vrot.slane %v194, 4
    %v196 = vadd.f32 %v194, %v195
    %v197 = vrot.slane %v196, 2
    %v198 = vadd.f32 %v196, %v197
    %v199 = vrot.slane %v198, 1
    %v200 = vadd.f32 %v198, %v199
    %v201 = vsel %vm56, %v146, 0.0
    %v202 = vrot.slane %v201, 4
    %v203 = vadd.f32 %v201, %v202
    %v204 = vrot.slane %v203, 2
    %v205 = vadd.f32 %v203, %v204
    %v206 = vrot.slane %v205, 1
    %v207 = vadd.f32 %v205, %v206
    %v208 = vsel %vm56, %v184, 0.0
    %v209 = vrot.slane %v208, 4
    %v210 = vadd.f32 %v208, %v209
    %v211 = vrot.slane %v210, 2
    %v212 = vadd.f32 %v210, %v211
    %v213 = vrot.slane %v212, 1
    %v214 = vadd.f32 %v212, %v213
    %v215 = vsub.f32 %v137, %v93
    %v216 = vsub.f32 %v138, %v94
    %v217 = vmul.f32 %v144, %v215
    %v218 = vmul.f32 %v146, %v216
    %v221 = vcombine.high %v217, %v217
    %v222 = vcombine.high %v218, %v218
    %v225 = vsel %vm56, %v217, 0.0
    %v226 = vrot.slane %v225, 4
    %v227 = vadd.f32 %v225, %v226
    %v228 = vrot.slane %v227, 2
    %v229 = vadd.f32 %v227, %v228
    %v230 = vrot.slane %v229, 1
    %v231 = vadd.f32 %v229, %v230
    %v232 = vsel %vm56, %v221, 0.0
    %v233 = vrot.slane %v232, 4
    %v234 = vadd.f32 %v232, %v233
    %v235 = vrot.slane %v234, 2
    %v236 = vadd.f32 %v234, %v235
    %v237 = vrot.slane %v236, 1
    %v238 = vadd.f32 %v236, %v237
    %v239 = vsel %vm56, %v218, 0.0
    %v240 = vrot.slane %v239, 4
    %v241 = vadd.f32 %v239, %v240
    %v242 = vrot.slane %v241, 2
    %v243 = vadd.f32 %v241, %v242
    %v244 = vrot.slane %v243, 1
    %v245 = vadd.f32 %v243, %v244
    %v246 = vsel %vm56, %v222, 0.0
    %v247 = vrot.slane %v246, 4
    %v248 = vadd.f32 %v246, %v247
    %v249 = vrot.slane %v248, 2
    %v250 = vadd.f32 %v248, %v249
    %v251 = vrot.slane %v250, 1
    %v252 = vadd.f32 %v250, %v251
    %v253 = vrcp.pop %v193
    %v254 = vrcp.pop %v200
    %v255 = vrcp.pop %v207
    %v256 = vrcp.pop %v214
    %v257 = vmul.f32 %v231, %v253
    %v258 = vmul.f32 %v238, %v254
    %v259 = vmul.f32 %v245, %v255
    %v260 = vmul.f32 %v252, %v256
    %v261 = vlog2.pop %v159
    %v262 = vmul.f32 %v261, 0.6931472
    %v263 = vlog2.pop %v166
    %v264 = vmul.f32 %v263, 0.6931472
    %v265 = vlog2.pop %v173
    %v266 = vmul.f32 %v265, 0.6931472
    %v267 = vlog2.pop %v180
    %v268 = vmul.f32 %v267, 0.6931472
    %v269 = vlog2.pop %v193
    %v270 = vmul.f32 %v269, 0.6931472
    %v271 = vlog2.pop %v200
    %v272 = vmul.f32 %v271, 0.6931472
    %v273 = vlog2.pop %v207
    %v274 = vmul.f32 %v273, 0.6931472
    %v275 = vlog2.pop %v214
    %v276 = vmul.f32 %v275, 0.6931472
    %v277 = vsub.f32 %v262, %v270
    %v278 = vsub.f32 %v264, %v272
    %v279 = vsub.f32 %v266, %v274
    %v280 = vsub.f32 %v268, %v276
    %v281 = vadd.f32 %v257, %v277
    %v282 = vadd.f32 %v258, %v278
    %v283 = vadd.f32 %v259, %v279
    %v284 = vadd.f32 %v260, %v280
    %v285 = vld [vmem:[#allocation7] sm:$0x1]
    %vm286 = vcmask 1040384
    %v287 = vsel %vm286, %v281, 0.0
    %v288 = vsel %vm286, %v282, 0.0
    %v289 = vadd.f32 %v287, %v288
    %v290 = vsel %vm286, %v283, 0.0
    %v291 = vadd.f32 %v289, %v290
    %v292 = vsel %vm286, %v284, 0.0
    %v293 = vadd.f32 %v291, %v292
    %294 = vadd.xlane.f32.xlu0 %v293
    %v295 = vpop.xlane.xlu0 %294
    %v296 = vrot.slane %v295, 4
    %v297 = vadd.f32 %v295, %v296
    %v298 = vrot.slane %v297, 2
    %v299 = vadd.f32 %v297, %v298
    %v300 = vrot.slane %v299, 1
    %v301 = vadd.f32 %v299, %v300
    %s302 = vtos %v301
    %v303 = vstv %s302
    %v304 = vadd.f32 %v285, %v303
    %vm305 = vcmask 0
    %306 = vst.msk [vmem:[#allocation7] sm:$0x1] %vm305, %v304
    // Predicated region
    $region22: #{tpu_custom_call.1} parent=1 // pred_check
      _
    $region23: #{tpu_custom_call.1} parent=1 // pred_check_branch
      %308 = sbr.rel (0) target = $region25
    $region24: #{tpu_custom_call.1} parent=1 // pred_region
      %s310 = ssub.s32 16, 16
      %311 = vsyncadd [#allocation4], %s310
      %s313 = sshll.u32 [#allocation7], 4
      %s314 = int_to_ptr.vmem [resolvable:$true] %s313
      %316 = dma.vmem_to_hbm [thread:$0]  %s314, 16, %s2, [#allocation4]
    $region25: #{tpu_custom_call.1} parent=1 // pred_fallthru
      _
    // Predicated region
    $region26: #{tpu_custom_call.1} parent=1 // pred_check
      _
    $region27: #{tpu_custom_call.1} parent=1 // pred_check_branch
      %318 = sbr.rel (0) target = $region29
    $region28: #{tpu_custom_call.1} parent=1 // pred_region
      %319 = dma.done [#allocation4], 16
    $region29: #{tpu_custom_call.1} parent=1 // pred_fallthru
      _
    %320 = vsyncpa [#allocation3], 1
    %321 = vsyncpa [#allocation6], 1
    %322 = vsyncpa [#allocation4], 1

</llo_original>
